<compile_context>
chip_gen: v6e
topology: v6e:2x2x1
jax: 0.10.0
libtpu: 0.0.40
codegen_flags: <defaults>
</compile_context>

<pallas_src>
import functools

import jax
import jax.numpy as jnp
from jax import lax
from jax.experimental import pallas as pl
from jax.experimental.pallas import tpu as pltpu

EPS = 1e-5


# --------------------------------------------------------------------------
# Kernel bodies
# --------------------------------------------------------------------------
def _instance_norm_block(x_ref, w_ref, b_ref, o_ref, *, inv_hw, eps, hw_valid):
    """Normalize one (Cb, HWp) tile.  hw_valid = real (unpadded) lane count."""
    x32 = x_ref[...].astype(jnp.float32)                        # (Cb, HWp)
    mean = jnp.sum(x32, axis=-1, keepdims=True) * inv_hw        # (Cb, 1)
    d = x32 - mean
    if hw_valid != x32.shape[-1]:  # static: lane padding present
        lane = lax.broadcasted_iota(jnp.int32, x32.shape, x32.ndim - 1)
        d = jnp.where(lane < hw_valid, d, 0.0)
    var = jnp.sum(d * d, axis=-1, keepdims=True) * inv_hw        # biased (PyTorch IN)
    inv = lax.rsqrt(var + eps)                                   # EUP slot
    scale = w_ref[...] * inv                                     # (Cb, 1) f32
    shift = b_ref[...] - mean * scale
    o_ref[...] = (x32 * scale + shift).astype(o_ref.dtype)


def _norm_half_kernel(x_ref, w_ref, b_ref, o_ref, *, inv_hw, eps, hw_valid):
    """Grid covers only the normalized half; pass-through half is aliased."""
    _instance_norm_block(x_ref, w_ref, b_ref, o_ref,
                         inv_hw=inv_hw, eps=eps, hw_valid=hw_valid)


def _fused_kernel(x_ref, w_ref, b_ref, o_ref, *, inv_hw, eps, hw_valid):
    """Grid covers both halves (axis 1 = half index); half 1 is a pure copy."""
    half = pl.program_id(1)

    @pl.when(half == 1)
    def _copy():
        o_ref[...] = x_ref[...]

    @pl.when(half == 0)
    def _norm():
        _instance_norm_block(x_ref, w_ref, b_ref, o_ref,
                             inv_hw=inv_hw, eps=eps, hw_valid=hw_valid)


# --------------------------------------------------------------------------
# Tiling / VMEM budgeting
# --------------------------------------------------------------------------
def _vmem_capacity_bytes():
    try:
        cap = getattr(pltpu.get_tpu_info(), "vmem_capacity_bytes", None)
        if cap:
            return int(cap)
    except Exception:
        pass
    return 64 * 1024 * 1024  # conservative default (v7x per-TC)


def _tile_vmem_use(cb, hwp, itemsize):
    tile = cb * hwp * itemsize
    f32_tile = cb * hwp * 4
    # 2x double-buffered input + 2x double-buffered output + ~2 f32 intermediates
    return 4 * tile + 2 * f32_tile


def _pick_channel_block(ch, hwp, itemsize, n_batch):
    """Largest Cb with ch % Cb == 0, dtype-aware sublane legality, and tile
    VMEM use within ~half the physical VMEM of this generation."""
    pack = 8 * max(1, 4 // itemsize)  # f32 -> 8, bf16 -> 16, int8/fp8 -> 32
    cands = [d for d in range(1, ch + 1)
             if ch % d == 0 and (d % pack == 0 or d == ch)]
    budget = _vmem_capacity_bytes() // 2  # headroom for pipeline/compiler scratch
    fitting = [d for d in cands if _tile_vmem_use(d, hwp, itemsize) <= budget]
    # TODO(synk): spatial (HW) two-pass blocking when even min(cands) overflows.
    cb = max(fitting) if fitting else min(cands)
    # v7x has 2 TensorCores: prefer a grid with >= 2 parallel programs.
    if n_batch * (ch // cb) < 2:
        smaller = [d for d in (fitting or cands) if d < cb]
        if smaller:
            cb = max(smaller)
    return cb


# --------------------------------------------------------------------------
# Wrapper
# --------------------------------------------------------------------------
def half_in(x, weight, bias, *, eps=EPS, inplace=True):
    """Half_IN forward.  x: (N, C, H, W); weight/bias: (C//2,)."""
    N, C, H, W = x.shape
    ch = C // 2
    hw = H * W

    # Lane-dense layout; half split as its own axis (free row-major reshape).
    x4 = x.reshape(N, 2, ch, hw)

    # Pad H*W to a 128-lane multiple (unmasked vst); masked out of the stats.
    hwp = ((hw + 127) // 128) * 128
    padded = hwp != hw
    if padded:
        x4 = jnp.pad(x4, ((0, 0), (0, 0), (0, 0), (0, hwp - hw)))

    w2 = weight.astype(jnp.float32).reshape(ch, 1)
    b2 = bias.astype(jnp.float32).reshape(ch, 1)

    cb = _pick_channel_block(ch, hwp, x.dtype.itemsize, N)
    vmem_limit = int(min(_vmem_capacity_bytes(),
                         max(32 * 1024 * 1024,
                             2 * _tile_vmem_use(cb, hwp, x.dtype.itemsize))))

    out_shape = jax.ShapeDtypeStruct((N, 2, ch, hwp), x.dtype)
    inv_hw = 1.0 / hw

    if inplace:
        # Touch only the normalized half; the pass-through half is carried by
        # aliasing the input buffer to the output.  Donate x under jit for the
        # full ~2x HBM-traffic win (otherwise XLA inserts a copy of x).
        kernel = functools.partial(_norm_half_kernel,
                                   inv_hw=inv_hw, eps=eps, hw_valid=hw)
        x_spec = pl.BlockSpec((None, None, cb, hwp), lambda n, c: (n, 0, c, 0))
        p_spec = pl.BlockSpec((cb, 1), lambda n, c: (c, 0))
        y4 = pl.pallas_call(
            kernel,
            out_shape=out_shape,
            grid=(N, ch // cb),
            in_specs=[x_spec, p_spec, p_spec],
            out_specs=x_spec,
            input_output_aliases={0: 0},
            compiler_params=pltpu.CompilerParams(
                dimension_semantics=("parallel", "parallel"),
                vmem_limit_bytes=vmem_limit),
        )(x4, w2, b2)
    else:
        # Fused read-once/write-once path (no donation / aliasing required).
        kernel = functools.partial(_fused_kernel,
                                   inv_hw=inv_hw, eps=eps, hw_valid=hw)
        x_spec = pl.BlockSpec((None, None, cb, hwp), lambda n, h, c: (n, h, c, 0))
        p_spec = pl.BlockSpec((cb, 1), lambda n, h, c: (c, 0))
        y4 = pl.pallas_call(
            kernel,
            out_shape=out_shape,
            grid=(N, 2, ch // cb),
            in_specs=[x_spec, p_spec, p_spec],
            out_specs=x_spec,
            compiler_params=pltpu.CompilerParams(
                dimension_semantics=("parallel", "parallel", "parallel"),
                vmem_limit_bytes=vmem_limit),
        )(x4, w2, b2)

    if padded:
        y4 = y4[..., :hw]
    return y4.reshape(N, C, H, W)


# --------------------------------------------------------------------------
# Demo / correctness check
# --------------------------------------------------------------------------
if __name__ == "__main__":
    N, C, H, W = 2, 4, 16, 16          # feature = 4 -> norm over first 2 channels
    ch = C // 2

    key = jax.random.PRNGKey(0)
    x = jax.random.normal(key, (N, C, H, W), dtype=jnp.float32)

    # PyTorch init is weight=1, bias=0; perturb so the affine path is exercised.
    weight = 1.0 + 0.1 * jnp.arange(ch, dtype=jnp.float32)
    bias = 0.01 * jnp.arange(ch, dtype=jnp.float32)

    # Pure-JAX reference (InstanceNorm2d semantics on the first half).
    x1 = x[:, :ch]
    mean = x1.mean(axis=(2, 3), keepdims=True)
    var = x1.var(axis=(2, 3), keepdims=True)        # biased, like PyTorch IN
    ref1 = (x1 - mean) / jnp.sqrt(var + EPS)
    ref1 = ref1 * weight[None, :, None, None] + bias[None, :, None, None]
    ref = jnp.concatenate([ref1, x[:, ch:]], axis=1)
    ref = jax.block_until_ready(ref)

    # Fused (no-donation) fallback path.
    fused_fn = jax.jit(functools.partial(half_in, inplace=False))
    out_fused = jax.block_until_ready(fused_fn(x, weight, bias))
    assert out_fused.shape == (N, C, H, W)
    assert jnp.allclose(out_fused, ref, atol=2e-5, rtol=2e-5), "fused path mismatch"

    # Primary half-grid + aliased path (donate x under jit for the full win).
    inplace_fn = jax.jit(functools.partial(half_in, inplace=True))
    out_inplace = jax.block_until_ready(inplace_fn(x, weight, bias))
    assert out_inplace.shape == (N, C, H, W)
    assert jnp.allclose(out_inplace, ref, atol=2e-5, rtol=2e-5), "inplace path mismatch"

    print("KERNEL_OK")
</pallas_src>

<mosaic_0001>
module attributes {stable_mosaic.version = 11 : i64} {
  func.func @_fused_kernel(%arg0: i32, %arg1: i32, %arg2: i32, %arg3: memref<1x1x2x256xf32, #tpu.memory_space<vmem>>, %arg4: memref<2x1xf32, #tpu.memory_space<vmem>>, %arg5: memref<2x1xf32, #tpu.memory_space<vmem>>, %arg6: memref<1x1x2x256xf32, #tpu.memory_space<vmem>>) attributes {dimension_semantics = [#tpu.dimension_semantics<parallel>, #tpu.dimension_semantics<parallel>, #tpu.dimension_semantics<parallel>], iteration_bounds = array<i64: 2, 2, 1>, scalar_prefetch = 0 : i64, scratch_operands = 0 : i64, tpu.core_type = #tpu.core_type<tc>, window_params = [{transform_indices = @transform_0, window_bounds = array<i64: 1, 1, 2, 256>}, {transform_indices = @transform_1, window_bounds = array<i64: 2, 1>}, {transform_indices = @transform_2, window_bounds = array<i64: 2, 1>}, {transform_indices = @transform_3, window_bounds = array<i64: 1, 1, 2, 256>}]} {
    %c1_i32 = arith.constant 1 : i32
    %0 = arith.cmpi eq, %arg1, %c1_i32 : i32
    %1 = arith.extui %0 : i1 to i32
    %c0_i32 = arith.constant 0 : i32
    %2 = arith.cmpi ne, %1, %c0_i32 : i32
    scf.if %2 {
      %c0 = arith.constant 0 : index
      %c0_2 = arith.constant 0 : index
      %c0_3 = arith.constant 0 : index
      %c0_4 = arith.constant 0 : index
      %6 = vector.load %arg3[%c0, %c0_2, %c0_3, %c0_4] : memref<1x1x2x256xf32, #tpu.memory_space<vmem>>, vector<1x1x2x256xf32>
      %7 = vector.shape_cast %6 : vector<1x1x2x256xf32> to vector<2x256xf32>
      %c0_5 = arith.constant 0 : index
      %c0_6 = arith.constant 0 : index
      %c0_7 = arith.constant 0 : index
      %c0_8 = arith.constant 0 : index
      %8 = vector.load %arg6[%c0_5, %c0_6, %c0_7, %c0_8] : memref<1x1x2x256xf32, #tpu.memory_space<vmem>>, vector<1x1x2x256xf32>
      %9 = vector.shape_cast %8 : vector<1x1x2x256xf32> to vector<2x256xf32>
      %10 = vector.shape_cast %7 : vector<2x256xf32> to vector<1x1x2x256xf32>
      tpu.vector_store %arg6[%c0_5, %c0_6, %c0_7, %c0_8], %10 {strides = array<i32>} : memref<1x1x2x256xf32, #tpu.memory_space<vmem>>, vector<1x1x2x256xf32>,
    } else {
    }
    %c0_i32_0 = arith.constant 0 : i32
    %3 = arith.cmpi eq, %arg1, %c0_i32_0 : i32
    %4 = arith.extui %3 : i1 to i32
    %c0_i32_1 = arith.constant 0 : i32
    %5 = arith.cmpi ne, %4, %c0_i32_1 : i32
    scf.if %5 {
      %c0 = arith.constant 0 : index
      %c0_2 = arith.constant 0 : index
      %c0_3 = arith.constant 0 : index
      %c0_4 = arith.constant 0 : index
      %6 = vector.load %arg3[%c0, %c0_2, %c0_3, %c0_4] : memref<1x1x2x256xf32, #tpu.memory_space<vmem>>, vector<1x1x2x256xf32>
      %7 = vector.shape_cast %6 : vector<1x1x2x256xf32> to vector<2x256xf32>
      %cst = arith.constant dense<0.000000e+00> : vector<2xf32>
      %8 = vector.multi_reduction <add>, %7, %cst [1] : vector<2x256xf32> to vector<2xf32>
      %9 = vector.shape_cast %8 : vector<2xf32> to vector<2x1xf32>
      %cst_5 = arith.constant 3.906250e-03 : f32
      %10 = vector.broadcast %cst_5 : f32 to vector<2x1xf32>
      %11 = arith.mulf %9, %10 : vector<2x1xf32>
      %12 = vector.broadcast %11 : vector<2x1xf32> to vector<2x256xf32>
      %13 = arith.subf %7, %12 : vector<2x256xf32>
      %14 = arith.mulf %13, %13 : vector<2x256xf32>
      %cst_6 = arith.constant dense<0.000000e+00> : vector<2xf32>
      %15 = vector.multi_reduction <add>, %14, %cst_6 [1] : vector<2x256xf32> to vector<2xf32>
      %16 = vector.shape_cast %15 : vector<2xf32> to vector<2x1xf32>
      %cst_7 = arith.constant 3.906250e-03 : f32
      %17 = vector.broadcast %cst_7 : f32 to vector<2x1xf32>
      %18 = arith.mulf %16, %17 : vector<2x1xf32>
      %cst_8 = arith.constant 9.99999974E-6 : f32
      %19 = vector.broadcast %cst_8 : f32 to vector<2x1xf32>
      %20 = arith.addf %18, %19 : vector<2x1xf32>
      %21 = math.rsqrt %20 : vector<2x1xf32>
      %c0_9 = arith.constant 0 : index
      %c0_10 = arith.constant 0 : index
      %22 = vector.load %arg4[%c0_9, %c0_10] : memref<2x1xf32, #tpu.memory_space<vmem>>, vector<2x1xf32>
      %23 = arith.mulf %22, %21 : vector<2x1xf32>
      %c0_11 = arith.constant 0 : index
      %c0_12 = arith.constant 0 : index
      %24 = vector.load %arg5[%c0_11, %c0_12] : memref<2x1xf32, #tpu.memory_space<vmem>>, vector<2x1xf32>
      %25 = arith.mulf %11, %23 : vector<2x1xf32>
      %26 = arith.subf %24, %25 : vector<2x1xf32>
      %27 = vector.broadcast %23 : vector<2x1xf32> to vector<2x256xf32>
      %28 = arith.mulf %7, %27 : vector<2x256xf32>
      %29 = vector.broadcast %26 : vector<2x1xf32> to vector<2x256xf32>
      %30 = arith.addf %28, %29 : vector<2x256xf32>
      %c0_13 = arith.constant 0 : index
      %c0_14 = arith.constant 0 : index
      %c0_15 = arith.constant 0 : index
      %c0_16 = arith.constant 0 : index
      %31 = vector.load %arg6[%c0_13, %c0_14, %c0_15, %c0_16] : memref<1x1x2x256xf32, #tpu.memory_space<vmem>>, vector<1x1x2x256xf32>
      %32 = vector.shape_cast %31 : vector<1x1x2x256xf32> to vector<2x256xf32>
      %33 = vector.shape_cast %30 : vector<2x256xf32> to vector<1x1x2x256xf32>
      tpu.vector_store %arg6[%c0_13, %c0_14, %c0_15, %c0_16], %33 {strides = array<i32>} : memref<1x1x2x256xf32, #tpu.memory_space<vmem>>, vector<1x1x2x256xf32>,
    } else {
    }
    return
  }
  func.func @transform_0(%arg0: i32, %arg1: i32, %arg2: i32) -> (i32, i32, i32, i32) {
    %c0_i32 = arith.constant 0 : i32
    %c0_i32_0 = arith.constant 0 : i32
    return %arg0, %arg1, %arg2, %c0_i32 : i32, i32, i32, i32
  }
  func.func @transform_1(%arg0: i32, %arg1: i32, %arg2: i32) -> (i32, i32) {
    %c0_i32 = arith.constant 0 : i32
    %c0_i32_0 = arith.constant 0 : i32
    return %arg2, %c0_i32 : i32, i32
  }
  func.func @transform_2(%arg0: i32, %arg1: i32, %arg2: i32) -> (i32, i32) {
    %c0_i32 = arith.constant 0 : i32
    %c0_i32_0 = arith.constant 0 : i32
    return %arg2, %c0_i32 : i32, i32
  }
  func.func @transform_3(%arg0: i32, %arg1: i32, %arg2: i32) -> (i32, i32, i32, i32) {
    %c0_i32 = arith.constant 0 : i32
    %c0_i32_0 = arith.constant 0 : i32
    return %arg0, %arg1, %arg2, %c0_i32 : i32, i32, i32, i32
  }
}

</mosaic_0001>

<llo_original>
// kernel: half_in.1
$region0: #{half_in.1}
  #allocation0 [shape = 'u32[]', space=smem, size = 0x4, offset = 0x4, fixed_abs, tag = 'smem constant byte address 0x4 - core index']
  #allocation1 [shape = 'u32[144,128]{1,0:T(1,128)}', space=vmem, size = 0x12000, scoped, tag = 'internal scratch']
  %s0 = inlined_call_operand.vmem [shape: f32[2,2,2,256], index: 0, kind: input, shape index: {}]
  %s1 = inlined_call_operand.vmem [shape: f32[2,1], index: 1, kind: input, shape index: {}]
  %s2 = inlined_call_operand.vmem [shape: f32[2,1], index: 2, kind: input, shape index: {}]
  %s3 = inlined_call_operand.vmem [shape: f32[2,2,2,256], index: 3, kind: output, shape index: {}]
  %s4 = sld [smem:[#allocation0]]
  $region53: #{half_in.1} parent=0
    _
  %s6 = ssub.s32 1, %s4
  %s7 = scalar_select 0, %s6, %s4
  loop: start=0, step=1, limit=6
  $region2: #{half_in.1} parent=0 // loop_pre_header
    _
  $region3: #{half_in.1} parent=0 // loop_header
    %s9 = sphi 0, %s13
    %p10 = scmp.ge.s32.totalorder %s9, 6
    %s16 = sphi 0, %s35
    %s17 = sphi 0, %s31
    %s18 = sphi 0, %s27
    %s19 = sphi 0, %s16
    %s20 = sphi 0, %s17
    %s21 = sphi 0, %s18
    %s22 = sphi 0, %s19
    %s23 = sphi 0, %s20
    %s24 = sphi 0, %s21
    %s42 = sphi 0, %s44
    %s45 = sphi 0, %s42
    %s46 = sphi 0, %s45
    %s62 = sphi 0, %s46
    %s68 = sphi 0, %s70
    %s71 = sphi 0, %s68
    %s72 = sphi 0, %s71
    %s88 = sphi 0, %s72
    %s94 = sphi 0, %s96
    %s97 = sphi 0, %s94
    %s98 = sphi 0, %s97
    %s114 = sphi 0, %s98
    %s124 = sphi 0, %s126
    %s127 = sphi 0, %s124
    %s128 = sphi 0, %s127
    %s144 = sphi 0, %s128
  $region4: #{half_in.1} parent=0 // loop_header_branch
    %12 = sbr.rel (%p10) target = $region8
  $region5: #{half_in.1} parent=0 // loop_body
    %s14 = ssub.s32 %s9, 1
    %s15 = ssub.s32 %s9, 2
    %s25 = sadd.s32 1, %s18
    %p26 = scmp.ge.s32.totalorder %s25, 1
    %s27 = scalar_select %p26, 0, %s25
    %s28 = sadd.s32 1, %s17
    %s29 = scalar_select %p26, %s28, %s17
    %p30 = scmp.ge.s32.totalorder %s29, 2
    %s31 = scalar_select %p30, 0, %s29
    %s32 = sadd.s32 1, %s16
    %s33 = scalar_select %p30, %s32, %s16
    %p34 = scmp.ge.s32.totalorder %s33, 2
    %s35 = scalar_select %p34, 0, %s33
    %s36 = ssub.s32 %s16, %s35
    %s37 = ssub.s32 %s17, %s31
    %s38 = sor.u32 %s36, %s37
    %s39 = ssub.s32 %s18, %s27
    %s40 = sor.u32 %s38, %s39
    %p41 = scmp.eq.s32.totalorder %s40, 0
    %s43 = sadd.s32 %s42, 1
    %s44 = scalar_select %p41, %s42, %s43
    %p47 = pneg %p41
    %p48 = scmp.eq.s32.totalorder %s9, 3
    %p49 = por %p47, %p48
    %p50 = scmp.ne.s32.totalorder %s42, %s45
    %p51 = scmp.eq.s32.totalorder %s9, 0
    %p52 = por %p50, %p51
    %p53 = scmp.ne.s32.totalorder %s42, %s45
    %p54 = scmp.eq.s32.totalorder %s14, 3
    %p55 = por %p53, %p54
    %p56 = scmp.ne.s32.totalorder %s45, %s46
    %p57 = scmp.eq.s32.totalorder %s14, 0
    %p58 = por %p56, %p57
    %p59 = scmp.ne.s32.totalorder %s45, %s46
    %p60 = scmp.eq.s32.totalorder %s15, 3
    %p61 = por %p59, %p60
    %p63 = scmp.ne.s32.totalorder %s46, %s62
    %p64 = scmp.eq.s32.totalorder %s15, 0
    %p65 = por %p63, %p64
    %s66 = ssub.s32 %s18, %s27
    %p67 = scmp.eq.s32.totalorder %s66, 0
    %s69 = sadd.s32 %s68, 1
    %s70 = scalar_select %p67, %s68, %s69
    %p73 = pneg %p67
    %p74 = scmp.eq.s32.totalorder %s9, 3
    %p75 = por %p73, %p74
    %p76 = scmp.ne.s32.totalorder %s68, %s71
    %p77 = scmp.eq.s32.totalorder %s9, 0
    %p78 = por %p76, %p77
    %p79 = scmp.ne.s32.totalorder %s68, %s71
    %p80 = scmp.eq.s32.totalorder %s14, 3
    %p81 = por %p79, %p80
    %p82 = scmp.ne.s32.totalorder %s71, %s72
    %p83 = scmp.eq.s32.totalorder %s14, 0
    %p84 = por %p82, %p83
    %p85 = scmp.ne.s32.totalorder %s71, %s72
    %p86 = scmp.eq.s32.totalorder %s15, 3
    %p87 = por %p85, %p86
    %p89 = scmp.ne.s32.totalorder %s72, %s88
    %p90 = scmp.eq.s32.totalorder %s15, 0
    %p91 = por %p89, %p90
    %s92 = ssub.s32 %s18, %s27
    %p93 = scmp.eq.s32.totalorder %s92, 0
    %s95 = sadd.s32 %s94, 1
    %s96 = scalar_select %p93, %s94, %s95
    %p99 = pneg %p93
    %p100 = scmp.eq.s32.totalorder %s9, 3
    %p101 = por %p99, %p100
    %p102 = scmp.ne.s32.totalorder %s94, %s97
    %p103 = scmp.eq.s32.totalorder %s9, 0
    %p104 = por %p102, %p103
    %p105 = scmp.ne.s32.totalorder %s94, %s97
    %p106 = scmp.eq.s32.totalorder %s14, 3
    %p107 = por %p105, %p106
    %p108 = scmp.ne.s32.totalorder %s97, %s98
    %p109 = scmp.eq.s32.totalorder %s14, 0
    %p110 = por %p108, %p109
    %p111 = scmp.ne.s32.totalorder %s97, %s98
    %p112 = scmp.eq.s32.totalorder %s15, 3
    %p113 = por %p111, %p112
    %p115 = scmp.ne.s32.totalorder %s98, %s114
    %p116 = scmp.eq.s32.totalorder %s15, 0
    %p117 = por %p115, %p116
    %s118 = ssub.s32 %s16, %s35
    %s119 = ssub.s32 %s17, %s31
    %s120 = sor.u32 %s118, %s119
    %s121 = ssub.s32 %s18, %s27
    %s122 = sor.u32 %s120, %s121
    %p123 = scmp.eq.s32.totalorder %s122, 0
    %s125 = sadd.s32 %s124, 1
    %s126 = scalar_select %p123, %s124, %s125
    %p129 = pneg %p123
    %p130 = scmp.eq.s32.totalorder %s9, 3
    %p131 = por %p129, %p130
    %p132 = scmp.ne.s32.totalorder %s124, %s127
    %p133 = scmp.eq.s32.totalorder %s9, 0
    %p134 = por %p132, %p133
    %p135 = scmp.ne.s32.totalorder %s124, %s127
    %p136 = scmp.eq.s32.totalorder %s14, 3
    %p137 = por %p135, %p136
    %p138 = scmp.ne.s32.totalorder %s127, %s128
    %p139 = scmp.eq.s32.totalorder %s14, 0
    %p140 = por %p138, %p139
    %p141 = scmp.ne.s32.totalorder %s127, %s128
    %p142 = scmp.eq.s32.totalorder %s15, 3
    %p143 = por %p141, %p142
    %p145 = scmp.ne.s32.totalorder %s128, %s144
    %p146 = scmp.eq.s32.totalorder %s15, 0
    %p147 = por %p145, %p146
    %p148 = scmp.le.s32.totalorder 1, %s9
    %p149 = scmp.lt.s32.totalorder %s9, 5
    %p150 = pnand %p148, %p149
    %p151 = pneg %p150
    // Predicated region
    $region9: #{half_in.1} parent=5 // pred_check
      _
    $region10: #{half_in.1} parent=5 // pred_check_branch
      %153 = sbr.rel (%p150) target = $region12
    $region11: #{half_in.1} parent=5 // pred_region
      %s154 = ssub.s32 %s9, 1
      // Predicated region
      $region13: #{half_in.1} parent=11 // pred_check
        %p155 = pneg %p84
      $region14: #{half_in.1} parent=11 // pred_check_branch
        %157 = sbr.rel (%p155) target = $region16
      $region15: #{half_in.1} parent=11 // pred_region
        %p158 = scmp.lt.s32.totalorder %s21, 0
        %s159 = scalar_select %p158, %s21, 0
        %s160 = smul.addr %s159, 2
        %s161 = scalar_lea.vmem %s1, %s160
      $region16: #{half_in.1} parent=11 // pred_fallthru
        _
      // Predicated region
      $region17: #{half_in.1} parent=11 // pred_check
        %p162 = pneg %p110
      $region18: #{half_in.1} parent=11 // pred_check_branch
        %164 = sbr.rel (%p162) target = $region20
      $region19: #{half_in.1} parent=11 // pred_region
        %p165 = scmp.lt.s32.totalorder %s21, 0
        %s166 = scalar_select %p165, %s21, 0
        %s167 = smul.addr %s166, 2
        %s168 = scalar_lea.vmem %s2, %s167
      $region20: #{half_in.1} parent=11 // pred_fallthru
        _
    $region12: #{half_in.1} parent=5 // pred_fallthru
      _
    %p169 = scmp.lt.s32.totalorder %s9, 4
    // Predicated region
    $region21: #{half_in.1} parent=5 // pred_check
      %p170 = pneg %p169
    $region22: #{half_in.1} parent=5 // pred_check_branch
      %172 = sbr.rel (%p170) target = $region24
    $region23: #{half_in.1} parent=5 // pred_region
      // Predicated region
      $region25: #{half_in.1} parent=23 // pred_check
        %p173 = pneg %p52
      $region26: #{half_in.1} parent=23 // pred_check_branch
        %175 = sbr.rel (%p173) target = $region28
      $region27: #{half_in.1} parent=23 // pred_region
        %p176 = scmp.lt.s32.totalorder %s16, 1
        %s177 = scalar_select %p176, %s16, 1
        %p178 = scmp.lt.s32.totalorder %s17, 1
        %s179 = scalar_select %p178, %s17, 1
        %p180 = scmp.lt.s32.totalorder %s18, 0
        %s181 = scalar_select %p180, %s18, 0
        %s182 = smul.addr %s181, 2
        %s183 = smul.addr %s179, 2
        %s184 = sadd.s32 %s182, %s183
        %s185 = smul.addr %s177, 4
        %s186 = sadd.s32 %s184, %s185
        %s187 = smul.addr %s186, 2
        %s188 = scalar_lea.vmem %s0, %s187
      $region28: #{half_in.1} parent=23 // pred_fallthru
        _
    $region24: #{half_in.1} parent=5 // pred_fallthru
      _
    %p189 = scmp.le.s32.totalorder 1, %s9
    %p190 = scmp.lt.s32.totalorder %s9, 5
    %p191 = pnand %p189, %p190
    %p192 = pneg %p191
    // Predicated region
    $region29: #{half_in.1} parent=5 // pred_check
      _
    $region30: #{half_in.1} parent=5 // pred_check_branch
      %194 = sbr.rel (%p191) target = $region32
    $region31: #{half_in.1} parent=5 // pred_region
      %s195 = ssub.s32 %s9, 1
      %p196 = scmp.lt.s32.totalorder %s19, 1
      %s197 = scalar_select %p196, %s19, 1
      %p198 = scmp.lt.s32.totalorder %s20, 1
      %s199 = scalar_select %p198, %s20, 1
      %p200 = scmp.lt.s32.totalorder %s21, 0
      %s201 = scalar_select %p200, %s21, 0
      %s202 = smul.addr %s201, 2
      %s203 = smul.addr %s199, 2
      %s204 = sadd.s32 %s202, %s203
      %s205 = smul.addr %s197, 4
      %s206 = sadd.s32 %s204, %s205
      %s207 = smul.addr %s206, 2
      %s208 = scalar_lea.vmem %s0, %s207
      %p209 = pneg %p58
      %p210 = pneg %p55
      %p211 = scmp.lt.s32.totalorder %s21, 0
      %s212 = scalar_select %p211, %s21, 0
      %s213 = smul.addr %s212, 2
      %s214 = scalar_lea.vmem %s1, %s213
      %p215 = pneg %p84
      %p216 = pneg %p81
      %p217 = scmp.lt.s32.totalorder %s21, 0
      %s218 = scalar_select %p217, %s21, 0
      %s219 = smul.addr %s218, 2
      %s220 = scalar_lea.vmem %s2, %s219
      %p221 = pneg %p110
      %p222 = pneg %p107
      %p223 = pneg %p140
      %p224 = pneg %p137
      %p225 = scmp.lt.s32.totalorder %s19, 1
      %s226 = scalar_select %p225, %s19, 1
      %p227 = scmp.lt.s32.totalorder %s20, 1
      %s228 = scalar_select %p227, %s20, 1
      %p229 = scmp.lt.s32.totalorder %s21, 0
      %s230 = scalar_select %p229, %s21, 0
      %s231 = smul.addr %s230, 2
      %s232 = smul.addr %s228, 2
      %s233 = sadd.s32 %s231, %s232
      %s234 = smul.addr %s226, 4
      %s235 = sadd.s32 %s233, %s234
      %s236 = smul.addr %s235, 2
      %s237 = scalar_lea.vmem %s3, %s236
      %p238 = scmp.lt.s32.totalorder %s19, 1
      %s239 = scalar_select %p238, %s19, 1
      %p240 = scmp.lt.s32.totalorder %s20, 1
      %s241 = scalar_select %p240, %s20, 1
      %p242 = scmp.lt.s32.totalorder %s21, 0
      %s243 = scalar_select %p242, %s21, 0
      %s244 = smul.addr %s243, 2
      %s245 = smul.addr %s241, 2
      %s246 = sadd.s32 %s244, %s245
      %s247 = smul.addr %s239, 4
      %s248 = sadd.s32 %s246, %s247
      %s249 = smul.addr %s248, 2
      %s250 = scalar_lea.vmem %s0, %s249
      %p251 = scmp.lt.s32.totalorder %s21, 0
      %s252 = scalar_select %p251, %s21, 0
      %s253 = smul.addr %s252, 2
      %s254 = scalar_lea.vmem %s1, %s253
      %p255 = scmp.lt.s32.totalorder %s21, 0
      %s256 = scalar_select %p255, %s21, 0
      %s257 = smul.addr %s256, 2
      %s258 = scalar_lea.vmem %s2, %s257
      %p259 = scmp.lt.s32.totalorder %s19, 1
      %s260 = scalar_select %p259, %s19, 1
      %p261 = scmp.lt.s32.totalorder %s20, 1
      %s262 = scalar_select %p261, %s20, 1
      %p263 = scmp.lt.s32.totalorder %s21, 0
      %s264 = scalar_select %p263, %s21, 0
      %s265 = smul.addr %s264, 2
      %s266 = smul.addr %s262, 2
      %s267 = sadd.s32 %s265, %s266
      %s268 = smul.addr %s260, 4
      %s269 = sadd.s32 %s267, %s268
      %s270 = smul.addr %s269, 2
      %s271 = scalar_lea.vmem %s3, %s270
      %p272 = scmp.eq.s32.totalorder %s20, 1
      // Predicated region
      $region33: #{half_in.1} parent=31 // pred_check
        %p273 = pneg %p272
      $region34: #{half_in.1} parent=31 // pred_check_branch
        %275 = sbr.rel (%p273) target = $region36
      $region35: #{half_in.1} parent=31 // pred_region
        %v276 = vld [vmem:[%s250] sm:$0xf]
        %277 = vst [vmem:[%s271] sm:$0xf] %v276
      $region36: #{half_in.1} parent=31 // pred_fallthru
        _
      %p278 = scmp.eq.s32.totalorder %s20, 0
      // Predicated region
      $region37: #{half_in.1} parent=31 // pred_check
        %p279 = pneg %p278
      $region38: #{half_in.1} parent=31 // pred_check_branch
        %281 = sbr.rel (%p279) target = $region40
      $region39: #{half_in.1} parent=31 // pred_region
        %v282 = vld [vmem:[%s250] sm:$0xf]
        %v285 = vunpack.c.l.s4 1983009808
        %v286 = vunpack.c.0.s8 %v285
        %v287 = vlaneseq
        %v288 = vshrl.u32 %v287, 7
        %v289 = vsub.s32 %v286, %v288
        %v290 = vrot.slane %v282, %v289
        %v291 = vcombine.high %v290, %v290
        %vm294 = vcmask 1041408
        %v295 = vsel %vm294, %v290, 0.0
        %v296 = vsel %vm294, %v291, 0.0
        %v297 = vadd.f32 %v295, %v296
        %298 = vadd.xlane.f32.xlu0 %v297
        %v299 = vpop.xlane.xlu0 %298
        %v300 = vmul.f32 %v299, 0.00390625
        %v303 = vunpack.c.l.s4 269488144
        %v304 = vunpack.c.0.s8 %v303
        %v305 = vlaneseq
        %v306 = vshrl.u32 %v305, 7
        %v307 = vsub.s32 %v304, %v306
        %v308 = vrot.slane %v300, %v307
        %v310 = vsub.f32 %v282, %v308
        %v311 = vmul.f32 %v310, %v310
        %v314 = vunpack.c.l.s4 1983009808
        %v315 = vunpack.c.0.s8 %v314
        %v316 = vlaneseq
        %v317 = vshrl.u32 %v316, 7
        %v318 = vsub.s32 %v315, %v317
        %v319 = vrot.slane %v311, %v318
        %v320 = vcombine.high %v319, %v319
        %v323 = vsel %vm294, %v319, 0.0
        %v324 = vsel %vm294, %v320, 0.0
        %v325 = vadd.f32 %v323, %v324
        %326 = vadd.xlane.f32.xlu0 %v325
        %v327 = vpop.xlane.xlu0 %326
        %v328 = vmul.f32 %v327, 0.00390625
        %v329 = vadd.f32 %v328, 1e-05
        %v330 = vrsqrt.pop %v329
        %v331 = vld [vmem:[%s254] sm:$0x3]
        %v332 = vmul.f32 %v331, %v330
        %v333 = vld [vmem:[%s258] sm:$0x3]
        %v334 = vmul.f32 %v300, %v332
        %v335 = vsub.f32 %v333, %v334
        %337 = vset.pattern.permute.xlu0 0
        %338 = vperm.xlu0 %337, %v332
        %v339 = vpop.permute.xlu0 %338
        %v341 = vunpack.c.l.s4 269488144
        %v342 = vunpack.c.0.s8 %v341
        %v343 = vlaneseq
        %v344 = vshrl.u32 %v343, 7
        %v345 = vsub.s32 %v342, %v344
        %v346 = vrot.slane %v339, %v345
        %v348 = vmul.f32 %v282, %v346
        %350 = vset.pattern.permute.xlu0 0
        %351 = vperm.xlu0 %350, %v335
        %v352 = vpop.permute.xlu0 %351
        %v354 = vunpack.c.l.s4 269488144
        %v355 = vunpack.c.0.s8 %v354
        %v356 = vlaneseq
        %v357 = vshrl.u32 %v356, 7
        %v358 = vsub.s32 %v355, %v357
        %v359 = vrot.slane %v352, %v358
        %v361 = vadd.f32 %v348, %v359
        %362 = vst [vmem:[%s271] sm:$0xf] %v361
      $region40: #{half_in.1} parent=31 // pred_fallthru
        _
      %p363 = scmp.lt.s32.totalorder %s19, 1
      %s364 = scalar_select %p363, %s19, 1
      %p365 = scmp.lt.s32.totalorder %s20, 1
      %s366 = scalar_select %p365, %s20, 1
      %p367 = scmp.lt.s32.totalorder %s21, 0
      %s368 = scalar_select %p367, %s21, 0
      %s369 = smul.addr %s368, 2
      %s370 = smul.addr %s366, 2
      %s371 = sadd.s32 %s369, %s370
      %s372 = smul.addr %s364, 4
      %s373 = sadd.s32 %s371, %s372
      %s374 = smul.addr %s373, 2
      %s375 = scalar_lea.vmem %s3, %s374
      // Predicated region
      $region41: #{half_in.1} parent=31 // pred_check
        %p376 = pneg %p137
      $region42: #{half_in.1} parent=31 // pred_check_branch
        %378 = sbr.rel (%p376) target = $region44
      $region43: #{half_in.1} parent=31 // pred_region
        _
      $region44: #{half_in.1} parent=31 // pred_fallthru
        _
    $region32: #{half_in.1} parent=5 // pred_fallthru
      _
    %p379 = scmp.le.s32.totalorder 2, %s9
    // Predicated region
    $region45: #{half_in.1} parent=5 // pred_check
      %p380 = pneg %p379
    $region46: #{half_in.1} parent=5 // pred_check_branch
      %382 = sbr.rel (%p380) target = $region48
    $region47: #{half_in.1} parent=5 // pred_region
      %s383 = ssub.s32 %s9, 2
      // Predicated region
      $region49: #{half_in.1} parent=47 // pred_check
        %p384 = pneg %p143
      $region50: #{half_in.1} parent=47 // pred_check_branch
        %386 = sbr.rel (%p384) target = $region52
      $region51: #{half_in.1} parent=47 // pred_region
        %p387 = scmp.lt.s32.totalorder %s22, 1
        %s388 = scalar_select %p387, %s22, 1
        %p389 = scmp.lt.s32.totalorder %s23, 1
        %s390 = scalar_select %p389, %s23, 1
        %p391 = scmp.lt.s32.totalorder %s24, 0
        %s392 = scalar_select %p391, %s24, 0
        %s393 = smul.addr %s392, 2
        %s394 = smul.addr %s390, 2
        %s395 = sadd.s32 %s393, %s394
        %s396 = smul.addr %s388, 4
        %s397 = sadd.s32 %s395, %s396
        %s398 = smul.addr %s397, 2
        %s399 = scalar_lea.vmem %s3, %s398
      $region52: #{half_in.1} parent=47 // pred_fallthru
        _
    $region48: #{half_in.1} parent=5 // pred_fallthru
      _
  $region6: #{half_in.1} parent=0 // loop_footer
    %s13 = sadd.s32 1, %s9
  $region7: #{half_in.1} parent=0 // loop_footer_branch
    %8 = sbr.rel target = $region3
  $region8: #{half_in.1} parent=0 // loop_exit
    _

</llo_original>
